<compile_context>
chip_gen: v7x
topology: tpu7x:2x2x1
jax: 0.10.0
libtpu: 0.0.40
codegen_flags: <defaults>
</compile_context>

<pallas_src>
import jax
import jax.numpy as jnp
from jax.experimental import pallas as pl
from jax.experimental.pallas import tpu as pltpu


HIDDEN_SIZE = 64
INPUT_SIZE = 40


def rnn_kernel(x_ref, w_ih_ref, w_hh_ref, b_ref, w_fc_ref, out_ref, hs_ref, h_ref):
    """One time-chunk of the RNN forward.

    x_ref    : (Tc, Bp, I)  time-major chunk, batch padded to a multiple of 8
    w_ih_ref : (I, H)       b_ref   : (1, H)  (= b_ih + b_hh)
    w_hh_ref : (H, H)       w_fc_ref: (1, H)  (FC weight as a row)
    out_ref  : (Tc, Bp)     lane-dense FC output for this chunk (bias added outside)
    hs_ref   : VMEM scratch (Tc, Bp, H)  -- holds xw, overwritten in place with h_t
    h_ref    : VMEM scratch (Bp, H)      -- hidden state carried across time chunks
    """
    t_chunk = pl.program_id(0)
    Tc, Bp, I = x_ref.shape
    H = w_hh_ref.shape[0]

    # --- Initialize the carried hidden state at the start of the sequence -----
    @pl.when(t_chunk == 0)
    def _():
        h_ref[...] = jnp.zeros_like(h_ref)

    # --- Hoisted input projection for the whole chunk (one MXU matmul), -------
    # --- written straight into the (merged) hidden-state scratch. -------------
    x_all = x_ref[...].reshape(Tc * Bp, I)
    hs_ref[...] = (jnp.dot(x_all, w_ih_ref[...],
                           preferred_element_type=jnp.float32)
                   + b_ref[...]).reshape(Tc, Bp, H)

    w_hh = w_hh_ref[...]                                   # keep resident

    # --- Serial recurrence: only h @ W_hh + tanh on the critical path ---------
    def step(t, h):
        pre = hs_ref[t] + jnp.dot(h, w_hh, preferred_element_type=jnp.float32)
        h_new = jnp.tanh(pre)
        hs_ref[t] = h_new                                  # overwrite xw[t] in place
        return h_new

    h_last = jax.lax.fori_loop(0, Tc, step, h_ref[...], unroll=8)
    h_ref[...] = h_last                                    # carry into next chunk

    # --- Hoisted FC head: VPU multiply + lane reduce -> lane-dense (Tc, Bp) ---
    w_fc = w_fc_ref[...].reshape(1, 1, H)
    y = jnp.sum(hs_ref[...] * w_fc, axis=-1)               # (Tc, Bp)
    out_ref[...] = y.astype(out_ref.dtype)


def rnn_forward(x_btI, w_ih, w_hh, b_ih, b_hh, w_fc, b_fc, *, time_chunk=128):
    """x_btI: (B, T, I) float32. Returns (B, T, 1) float32."""
    B, T, I = x_btI.shape
    H = w_hh.shape[0]
    Bp = ((B + 7) // 8) * 8                                 # pad batch to sublane multiple

    # Time-chunk size: multiple of 8 (sublane tile), capped by requested chunk.
    Tc = min(time_chunk, T)
    Tc = max(8, ((Tc + 7) // 8) * 8)
    Tp = ((T + Tc - 1) // Tc) * Tc                          # pad T to a chunk multiple
    n_chunks = Tp // Tc

    x_tbI = jnp.transpose(x_btI, (1, 0, 2))                 # (T, B, I) time-major
    x_pad = jnp.pad(x_tbI, ((0, Tp - T), (0, Bp - B), (0, 0)))
    b_comb = (b_ih + b_hh).reshape(1, H)
    w_fc_row = w_fc.reshape(1, H)

    # VMEM footprint per chunk (128-lane padded, f32): 2x x-chunk + 1x hs + 2x out
    # ~= (3*Tc*Bp*128 + 2*Tc*128)*4 B -> well under the default scoped limit on all chips.
    out_tb = pl.pallas_call(
        rnn_kernel,
        out_shape=jax.ShapeDtypeStruct((Tp, Bp), jnp.float32),
        grid_spec=pltpu.PrefetchScalarGridSpec(
            num_scalar_prefetch=0,
            grid=(n_chunks,),                               # sequential time chunks
            in_specs=[
                pl.BlockSpec((Tc, Bp, I), lambda t: (t, 0, 0)),  # x chunk
                pl.BlockSpec((I, H), lambda t: (0, 0)),          # W_ih
                pl.BlockSpec((H, H), lambda t: (0, 0)),          # W_hh
                pl.BlockSpec((1, H), lambda t: (0, 0)),          # b_ih + b_hh
                pl.BlockSpec((1, H), lambda t: (0, 0)),          # W_fc (row)
            ],
            out_specs=pl.BlockSpec((Tc, Bp), lambda t: (t, 0)),
            scratch_shapes=[
                pltpu.VMEM((Tc, Bp, H), jnp.float32),       # merged xw / hidden states
                pltpu.VMEM((Bp, H), jnp.float32),           # carried hidden state
            ],
        ),
        compiler_params=pltpu.CompilerParams(
            dimension_semantics=("arbitrary",),             # carried h -> sequential
        ),
    )(x_pad, w_ih, w_hh, b_comb, w_fc_row)

    out_tb = out_tb + b_fc[0]                               # FC bias folded in wrapper
    out_bt = jnp.transpose(out_tb[:T, :B], (1, 0))          # (B, T)
    return out_bt[..., None]                                # (B, T, 1)


def reference_forward(x, w_ih, w_hh, b_ih, b_hh, w_fc, b_fc):
    """Pure-JAX reference matching torch nn.RNN(tanh) + Linear."""
    B, T, I = x.shape
    H = w_hh.shape[0]

    def step(h, x_t):
        h_new = jnp.tanh(x_t @ w_ih + h @ w_hh + b_ih + b_hh)
        return h_new, h_new

    _, hs = jax.lax.scan(step, jnp.zeros((B, H), jnp.float32),
                         jnp.transpose(x, (1, 0, 2)))
    out = hs @ w_fc + b_fc                                  # (T, B, 1)
    return jnp.transpose(out, (1, 0, 2))


if __name__ == "__main__":
    B, T, I, H = 4, 24, INPUT_SIZE, HIDDEN_SIZE             # T=24, Tc=8 -> 3 time chunks

    key = jax.random.PRNGKey(0)
    k_x, k_wih, k_whh, k_bih, k_bhh, k_wfc, k_bfc = jax.random.split(key, 7)

    # Deterministic param init mimicking torch's U(-1/sqrt(H), 1/sqrt(H)).
    bound = 1.0 / jnp.sqrt(jnp.float32(H))
    w_ih = jax.random.uniform(k_wih, (I, H), jnp.float32, -bound, bound)
    w_hh = jax.random.uniform(k_whh, (H, H), jnp.float32, -bound, bound)
    b_ih = jax.random.uniform(k_bih, (H,), jnp.float32, -bound, bound)
    b_hh = jax.random.uniform(k_bhh, (H,), jnp.float32, -bound, bound)
    w_fc = jax.random.uniform(k_wfc, (H, 1), jnp.float32, -bound, bound)
    b_fc = jax.random.uniform(k_bfc, (1,), jnp.float32, -bound, bound)

    x = jax.random.normal(k_x, (B, T, I), jnp.float32)

    out = rnn_forward(x, w_ih, w_hh, b_ih, b_hh, w_fc, b_fc, time_chunk=8)
    out = jax.block_until_ready(out)

    ref = reference_forward(x, w_ih, w_hh, b_ih, b_hh, w_fc, b_fc)
    assert out.shape == (B, T, 1)
    assert jnp.allclose(out, ref, atol=1e-4, rtol=1e-4), "mismatch vs reference"

    print("KERNEL_OK")
</pallas_src>

<mosaic_0001>
module attributes {stable_mosaic.version = 11 : i64} {
  func.func @rnn_kernel(%arg0: i32, %arg1: memref<8x8x40xf32, #tpu.memory_space<vmem>>, %arg2: memref<40x64xf32, #tpu.memory_space<vmem>>, %arg3: memref<64x64xf32, #tpu.memory_space<vmem>>, %arg4: memref<1x64xf32, #tpu.memory_space<vmem>>, %arg5: memref<1x64xf32, #tpu.memory_space<vmem>>, %arg6: memref<8x8xf32, #tpu.memory_space<vmem>>, %arg7: memref<8x8x64xf32, #tpu.memory_space<vmem>>, %arg8: memref<8x64xf32, #tpu.memory_space<vmem>>) attributes {dimension_semantics = [#tpu.dimension_semantics<arbitrary>], iteration_bounds = array<i64: 3>, scalar_prefetch = 0 : i64, scratch_operands = 2 : i64, tpu.core_type = #tpu.core_type<tc>, window_params = [{transform_indices = @transform_0, window_bounds = array<i64: 8, 8, 40>}, {pipeline_mode = #tpu.pipeline_mode<synchronous>, transform_indices = @transform_1, window_bounds = array<i64: 40, 64>}, {pipeline_mode = #tpu.pipeline_mode<synchronous>, transform_indices = @transform_2, window_bounds = array<i64: 64, 64>}, {pipeline_mode = #tpu.pipeline_mode<synchronous>, transform_indices = @transform_3, window_bounds = array<i64: 1, 64>}, {pipeline_mode = #tpu.pipeline_mode<synchronous>, transform_indices = @transform_4, window_bounds = array<i64: 1, 64>}, {transform_indices = @transform_5, window_bounds = array<i64: 8, 8>}]} {
    %c0_i32 = arith.constant 0 : i32
    %0 = arith.cmpi eq, %arg0, %c0_i32 : i32
    %1 = arith.extui %0 : i1 to i32
    %c0_i32_0 = arith.constant 0 : i32
    %2 = arith.cmpi ne, %1, %c0_i32_0 : i32
    scf.if %2 {
      %cst_65 = arith.constant 0.000000e+00 : f32
      %102 = vector.broadcast %cst_65 : f32 to vector<8x64xf32>
      %c0_66 = arith.constant 0 : index
      %c0_67 = arith.constant 0 : index
      %103 = vector.load %arg8[%c0_66, %c0_67] : memref<8x64xf32, #tpu.memory_space<vmem>>, vector<8x64xf32>
      tpu.vector_store %arg8[%c0_66, %c0_67], %102 {strides = array<i32>} : memref<8x64xf32, #tpu.memory_space<vmem>>, vector<8x64xf32>,
    } else {
    }
    %c0 = arith.constant 0 : index
    %c0_1 = arith.constant 0 : index
    %c0_2 = arith.constant 0 : index
    %3 = vector.load %arg1[%c0, %c0_1, %c0_2] : memref<8x8x40xf32, #tpu.memory_space<vmem>>, vector<8x8x40xf32>
    %4 = vector.shape_cast %3 : vector<8x8x40xf32> to vector<64x40xf32>
    %c0_3 = arith.constant 0 : index
    %c0_4 = arith.constant 0 : index
    %5 = vector.load %arg2[%c0_3, %c0_4] : memref<40x64xf32, #tpu.memory_space<vmem>>, vector<40x64xf32>
    %cst = arith.constant dense<0.000000e+00> : vector<64x64xf32>
    %6 = tpu.matmul %4, %5, %cst {dimension_numbers = #tpu.dot_dimension_numbers<[1], [0], [0], [1], [0, 0, 1, 1], [], []>} : vector<64x40xf32>, vector<40x64xf32>, vector<64x64xf32> -> vector<64x64xf32>
    %c0_5 = arith.constant 0 : index
    %c0_6 = arith.constant 0 : index
    %7 = vector.load %arg4[%c0_5, %c0_6] : memref<1x64xf32, #tpu.memory_space<vmem>>, vector<1x64xf32>
    %8 = vector.broadcast %7 : vector<1x64xf32> to vector<64x64xf32>
    %9 = arith.addf %6, %8 : vector<64x64xf32>
    %10 = vector.shape_cast %9 : vector<64x64xf32> to vector<8x8x64xf32>
    %c0_7 = arith.constant 0 : index
    %c0_8 = arith.constant 0 : index
    %c0_9 = arith.constant 0 : index
    %11 = vector.load %arg7[%c0_7, %c0_8, %c0_9] : memref<8x8x64xf32, #tpu.memory_space<vmem>>, vector<8x8x64xf32>
    tpu.vector_store %arg7[%c0_7, %c0_8, %c0_9], %10 {strides = array<i32>} : memref<8x8x64xf32, #tpu.memory_space<vmem>>, vector<8x8x64xf32>,
    %c0_10 = arith.constant 0 : index
    %c0_11 = arith.constant 0 : index
    %12 = vector.load %arg3[%c0_10, %c0_11] : memref<64x64xf32, #tpu.memory_space<vmem>>, vector<64x64xf32>
    %c0_12 = arith.constant 0 : index
    %c0_13 = arith.constant 0 : index
    %13 = vector.load %arg8[%c0_12, %c0_13] : memref<8x64xf32, #tpu.memory_space<vmem>>, vector<8x64xf32>
    %c0_i32_14 = arith.constant 0 : i32
    %14 = arith.index_cast %c0_i32_14 : i32 to index
    %c0_15 = arith.constant 0 : index
    %c0_16 = arith.constant 0 : index
    %15 = vector.load %arg7[%14, %c0_15, %c0_16] : memref<8x8x64xf32, #tpu.memory_space<vmem>>, vector<1x8x64xf32>
    %16 = vector.shape_cast %15 : vector<1x8x64xf32> to vector<8x64xf32>
    %cst_17 = arith.constant dense<0.000000e+00> : vector<8x64xf32>
    %17 = tpu.matmul %13, %12, %cst_17 {dimension_numbers = #tpu.dot_dimension_numbers<[1], [0], [0], [1], [0, 0, 1, 1], [], []>} : vector<8x64xf32>, vector<64x64xf32>, vector<8x64xf32> -> vector<8x64xf32>
    %18 = arith.addf %16, %17 : vector<8x64xf32>
    %19 = math.tanh %18 : vector<8x64xf32>
    %20 = arith.index_cast %c0_i32_14 : i32 to index
    %c0_18 = arith.constant 0 : index
    %c0_19 = arith.constant 0 : index
    %21 = vector.load %arg7[%20, %c0_18, %c0_19] : memref<8x8x64xf32, #tpu.memory_space<vmem>>, vector<1x8x64xf32>
    %22 = vector.shape_cast %21 : vector<1x8x64xf32> to vector<8x64xf32>
    %23 = vector.shape_cast %19 : vector<8x64xf32> to vector<1x8x64xf32>
    tpu.vector_store %arg7[%20, %c0_18, %c0_19], %23 {strides = array<i32>} : memref<8x8x64xf32, #tpu.memory_space<vmem>>, vector<1x8x64xf32>,
    %c1_i32 = arith.constant 1 : i32
    %24 = arith.index_cast %c1_i32 : i32 to index
    %c0_20 = arith.constant 0 : index
    %c0_21 = arith.constant 0 : index
    %25 = vector.load %arg7[%24, %c0_20, %c0_21] : memref<8x8x64xf32, #tpu.memory_space<vmem>>, vector<1x8x64xf32>
    %26 = vector.shape_cast %25 : vector<1x8x64xf32> to vector<8x64xf32>
    %cst_22 = arith.constant dense<0.000000e+00> : vector<8x64xf32>
    %27 = tpu.matmul %19, %12, %cst_22 {dimension_numbers = #tpu.dot_dimension_numbers<[1], [0], [0], [1], [0, 0, 1, 1], [], []>} : vector<8x64xf32>, vector<64x64xf32>, vector<8x64xf32> -> vector<8x64xf32>
    %28 = arith.addf %26, %27 : vector<8x64xf32>
    %29 = math.tanh %28 : vector<8x64xf32>
    %30 = arith.index_cast %c1_i32 : i32 to index
    %c0_23 = arith.constant 0 : index
    %c0_24 = arith.constant 0 : index
    %31 = vector.load %arg7[%30, %c0_23, %c0_24] : memref<8x8x64xf32, #tpu.memory_space<vmem>>, vector<1x8x64xf32>
    %32 = vector.shape_cast %31 : vector<1x8x64xf32> to vector<8x64xf32>
    %33 = vector.shape_cast %29 : vector<8x64xf32> to vector<1x8x64xf32>
    tpu.vector_store %arg7[%30, %c0_23, %c0_24], %33 {strides = array<i32>} : memref<8x8x64xf32, #tpu.memory_space<vmem>>, vector<1x8x64xf32>,
    %c2_i32 = arith.constant 2 : i32
    %34 = arith.index_cast %c2_i32 : i32 to index
    %c0_25 = arith.constant 0 : index
    %c0_26 = arith.constant 0 : index
    %35 = vector.load %arg7[%34, %c0_25, %c0_26] : memref<8x8x64xf32, #tpu.memory_space<vmem>>, vector<1x8x64xf32>
    %36 = vector.shape_cast %35 : vector<1x8x64xf32> to vector<8x64xf32>
    %cst_27 = arith.constant dense<0.000000e+00> : vector<8x64xf32>
    %37 = tpu.matmul %29, %12, %cst_27 {dimension_numbers = #tpu.dot_dimension_numbers<[1], [0], [0], [1], [0, 0, 1, 1], [], []>} : vector<8x64xf32>, vector<64x64xf32>, vector<8x64xf32> -> vector<8x64xf32>
    %38 = arith.addf %36, %37 : vector<8x64xf32>
    %39 = math.tanh %38 : vector<8x64xf32>
    %40 = arith.index_cast %c2_i32 : i32 to index
    %c0_28 = arith.constant 0 : index
    %c0_29 = arith.constant 0 : index
    %41 = vector.load %arg7[%40, %c0_28, %c0_29] : memref<8x8x64xf32, #tpu.memory_space<vmem>>, vector<1x8x64xf32>
    %42 = vector.shape_cast %41 : vector<1x8x64xf32> to vector<8x64xf32>
    %43 = vector.shape_cast %39 : vector<8x64xf32> to vector<1x8x64xf32>
    tpu.vector_store %arg7[%40, %c0_28, %c0_29], %43 {strides = array<i32>} : memref<8x8x64xf32, #tpu.memory_space<vmem>>, vector<1x8x64xf32>,
    %c3_i32 = arith.constant 3 : i32
    %44 = arith.index_cast %c3_i32 : i32 to index
    %c0_30 = arith.constant 0 : index
    %c0_31 = arith.constant 0 : index
    %45 = vector.load %arg7[%44, %c0_30, %c0_31] : memref<8x8x64xf32, #tpu.memory_space<vmem>>, vector<1x8x64xf32>
    %46 = vector.shape_cast %45 : vector<1x8x64xf32> to vector<8x64xf32>
    %cst_32 = arith.constant dense<0.000000e+00> : vector<8x64xf32>
    %47 = tpu.matmul %39, %12, %cst_32 {dimension_numbers = #tpu.dot_dimension_numbers<[1], [0], [0], [1], [0, 0, 1, 1], [], []>} : vector<8x64xf32>, vector<64x64xf32>, vector<8x64xf32> -> vector<8x64xf32>
    %48 = arith.addf %46, %47 : vector<8x64xf32>
    %49 = math.tanh %48 : vector<8x64xf32>
    %50 = arith.index_cast %c3_i32 : i32 to index
    %c0_33 = arith.constant 0 : index
    %c0_34 = arith.constant 0 : index
    %51 = vector.load %arg7[%50, %c0_33, %c0_34] : memref<8x8x64xf32, #tpu.memory_space<vmem>>, vector<1x8x64xf32>
    %52 = vector.shape_cast %51 : vector<1x8x64xf32> to vector<8x64xf32>
    %53 = vector.shape_cast %49 : vector<8x64xf32> to vector<1x8x64xf32>
    tpu.vector_store %arg7[%50, %c0_33, %c0_34], %53 {strides = array<i32>} : memref<8x8x64xf32, #tpu.memory_space<vmem>>, vector<1x8x64xf32>,
    %c4_i32 = arith.constant 4 : i32
    %54 = arith.index_cast %c4_i32 : i32 to index
    %c0_35 = arith.constant 0 : index
    %c0_36 = arith.constant 0 : index
    %55 = vector.load %arg7[%54, %c0_35, %c0_36] : memref<8x8x64xf32, #tpu.memory_space<vmem>>, vector<1x8x64xf32>
    %56 = vector.shape_cast %55 : vector<1x8x64xf32> to vector<8x64xf32>
    %cst_37 = arith.constant dense<0.000000e+00> : vector<8x64xf32>
    %57 = tpu.matmul %49, %12, %cst_37 {dimension_numbers = #tpu.dot_dimension_numbers<[1], [0], [0], [1], [0, 0, 1, 1], [], []>} : vector<8x64xf32>, vector<64x64xf32>, vector<8x64xf32> -> vector<8x64xf32>
    %58 = arith.addf %56, %57 : vector<8x64xf32>
    %59 = math.tanh %58 : vector<8x64xf32>
    %60 = arith.index_cast %c4_i32 : i32 to index
    %c0_38 = arith.constant 0 : index
    %c0_39 = arith.constant 0 : index
    %61 = vector.load %arg7[%60, %c0_38, %c0_39] : memref<8x8x64xf32, #tpu.memory_space<vmem>>, vector<1x8x64xf32>
    %62 = vector.shape_cast %61 : vector<1x8x64xf32> to vector<8x64xf32>
    %63 = vector.shape_cast %59 : vector<8x64xf32> to vector<1x8x64xf32>
    tpu.vector_store %arg7[%60, %c0_38, %c0_39], %63 {strides = array<i32>} : memref<8x8x64xf32, #tpu.memory_space<vmem>>, vector<1x8x64xf32>,
    %c5_i32 = arith.constant 5 : i32
    %64 = arith.index_cast %c5_i32 : i32 to index
    %c0_40 = arith.constant 0 : index
    %c0_41 = arith.constant 0 : index
    %65 = vector.load %arg7[%64, %c0_40, %c0_41] : memref<8x8x64xf32, #tpu.memory_space<vmem>>, vector<1x8x64xf32>
    %66 = vector.shape_cast %65 : vector<1x8x64xf32> to vector<8x64xf32>
    %cst_42 = arith.constant dense<0.000000e+00> : vector<8x64xf32>
    %67 = tpu.matmul %59, %12, %cst_42 {dimension_numbers = #tpu.dot_dimension_numbers<[1], [0], [0], [1], [0, 0, 1, 1], [], []>} : vector<8x64xf32>, vector<64x64xf32>, vector<8x64xf32> -> vector<8x64xf32>
    %68 = arith.addf %66, %67 : vector<8x64xf32>
    %69 = math.tanh %68 : vector<8x64xf32>
    %70 = arith.index_cast %c5_i32 : i32 to index
    %c0_43 = arith.constant 0 : index
    %c0_44 = arith.constant 0 : index
    %71 = vector.load %arg7[%70, %c0_43, %c0_44] : memref<8x8x64xf32, #tpu.memory_space<vmem>>, vector<1x8x64xf32>
    %72 = vector.shape_cast %71 : vector<1x8x64xf32> to vector<8x64xf32>
    %73 = vector.shape_cast %69 : vector<8x64xf32> to vector<1x8x64xf32>
    tpu.vector_store %arg7[%70, %c0_43, %c0_44], %73 {strides = array<i32>} : memref<8x8x64xf32, #tpu.memory_space<vmem>>, vector<1x8x64xf32>,
    %c6_i32 = arith.constant 6 : i32
    %74 = arith.index_cast %c6_i32 : i32 to index
    %c0_45 = arith.constant 0 : index
    %c0_46 = arith.constant 0 : index
    %75 = vector.load %arg7[%74, %c0_45, %c0_46] : memref<8x8x64xf32, #tpu.memory_space<vmem>>, vector<1x8x64xf32>
    %76 = vector.shape_cast %75 : vector<1x8x64xf32> to vector<8x64xf32>
    %cst_47 = arith.constant dense<0.000000e+00> : vector<8x64xf32>
    %77 = tpu.matmul %69, %12, %cst_47 {dimension_numbers = #tpu.dot_dimension_numbers<[1], [0], [0], [1], [0, 0, 1, 1], [], []>} : vector<8x64xf32>, vector<64x64xf32>, vector<8x64xf32> -> vector<8x64xf32>
    %78 = arith.addf %76, %77 : vector<8x64xf32>
    %79 = math.tanh %78 : vector<8x64xf32>
    %80 = arith.index_cast %c6_i32 : i32 to index
    %c0_48 = arith.constant 0 : index
    %c0_49 = arith.constant 0 : index
    %81 = vector.load %arg7[%80, %c0_48, %c0_49] : memref<8x8x64xf32, #tpu.memory_space<vmem>>, vector<1x8x64xf32>
    %82 = vector.shape_cast %81 : vector<1x8x64xf32> to vector<8x64xf32>
    %83 = vector.shape_cast %79 : vector<8x64xf32> to vector<1x8x64xf32>
    tpu.vector_store %arg7[%80, %c0_48, %c0_49], %83 {strides = array<i32>} : memref<8x8x64xf32, #tpu.memory_space<vmem>>, vector<1x8x64xf32>,
    %c7_i32 = arith.constant 7 : i32
    %84 = arith.index_cast %c7_i32 : i32 to index
    %c0_50 = arith.constant 0 : index
    %c0_51 = arith.constant 0 : index
    %85 = vector.load %arg7[%84, %c0_50, %c0_51] : memref<8x8x64xf32, #tpu.memory_space<vmem>>, vector<1x8x64xf32>
    %86 = vector.shape_cast %85 : vector<1x8x64xf32> to vector<8x64xf32>
    %cst_52 = arith.constant dense<0.000000e+00> : vector<8x64xf32>
    %87 = tpu.matmul %79, %12, %cst_52 {dimension_numbers = #tpu.dot_dimension_numbers<[1], [0], [0], [1], [0, 0, 1, 1], [], []>} : vector<8x64xf32>, vector<64x64xf32>, vector<8x64xf32> -> vector<8x64xf32>
    %88 = arith.addf %86, %87 : vector<8x64xf32>
    %89 = math.tanh %88 : vector<8x64xf32>
    %90 = arith.index_cast %c7_i32 : i32 to index
    %c0_53 = arith.constant 0 : index
    %c0_54 = arith.constant 0 : index
    %91 = vector.load %arg7[%90, %c0_53, %c0_54] : memref<8x8x64xf32, #tpu.memory_space<vmem>>, vector<1x8x64xf32>
    %92 = vector.shape_cast %91 : vector<1x8x64xf32> to vector<8x64xf32>
    %93 = vector.shape_cast %89 : vector<8x64xf32> to vector<1x8x64xf32>
    tpu.vector_store %arg7[%90, %c0_53, %c0_54], %93 {strides = array<i32>} : memref<8x8x64xf32, #tpu.memory_space<vmem>>, vector<1x8x64xf32>,
    %c8_i32 = arith.constant 8 : i32
    %c0_55 = arith.constant 0 : index
    %c0_56 = arith.constant 0 : index
    %94 = vector.load %arg8[%c0_55, %c0_56] : memref<8x64xf32, #tpu.memory_space<vmem>>, vector<8x64xf32>
    tpu.vector_store %arg8[%c0_55, %c0_56], %89 {strides = array<i32>} : memref<8x64xf32, #tpu.memory_space<vmem>>, vector<8x64xf32>,
    %c0_57 = arith.constant 0 : index
    %c0_58 = arith.constant 0 : index
    %95 = vector.load %arg5[%c0_57, %c0_58] : memref<1x64xf32, #tpu.memory_space<vmem>>, vector<1x64xf32>
    %96 = vector.shape_cast %95 : vector<1x64xf32> to vector<1x1x64xf32>
    %c0_59 = arith.constant 0 : index
    %c0_60 = arith.constant 0 : index
    %c0_61 = arith.constant 0 : index
    %97 = vector.load %arg7[%c0_59, %c0_60, %c0_61] : memref<8x8x64xf32, #tpu.memory_space<vmem>>, vector<8x8x64xf32>
    %98 = vector.broadcast %96 : vector<1x1x64xf32> to vector<8x8x64xf32>
    %99 = arith.mulf %97, %98 : vector<8x8x64xf32>
    %cst_62 = arith.constant dense<0.000000e+00> : vector<8x8xf32>
    %100 = vector.multi_reduction <add>, %99, %cst_62 [2] : vector<8x8x64xf32> to vector<8x8xf32>
    %c0_63 = arith.constant 0 : index
    %c0_64 = arith.constant 0 : index
    %101 = vector.load %arg6[%c0_63, %c0_64] : memref<8x8xf32, #tpu.memory_space<vmem>>, vector<8x8xf32>
    tpu.vector_store %arg6[%c0_63, %c0_64], %100 {strides = array<i32>} : memref<8x8xf32, #tpu.memory_space<vmem>>, vector<8x8xf32>,
    return
  }
  func.func @transform_0(%arg0: i32) -> (i32, i32, i32) {
    %c0_i32 = arith.constant 0 : i32
    %c0_i32_0 = arith.constant 0 : i32
    %c0_i32_1 = arith.constant 0 : i32
    return %arg0, %c0_i32, %c0_i32_0 : i32, i32, i32
  }
  func.func @transform_1(%arg0: i32) -> (i32, i32) {
    %c0_i32 = arith.constant 0 : i32
    %c0_i32_0 = arith.constant 0 : i32
    %c0_i32_1 = arith.constant 0 : i32
    return %c0_i32, %c0_i32_0 : i32, i32
  }
  func.func @transform_2(%arg0: i32) -> (i32, i32) {
    %c0_i32 = arith.constant 0 : i32
    %c0_i32_0 = arith.constant 0 : i32
    %c0_i32_1 = arith.constant 0 : i32
    return %c0_i32, %c0_i32_0 : i32, i32
  }
  func.func @transform_3(%arg0: i32) -> (i32, i32) {
    %c0_i32 = arith.constant 0 : i32
    %c0_i32_0 = arith.constant 0 : i32
    %c0_i32_1 = arith.constant 0 : i32
    return %c0_i32, %c0_i32_0 : i32, i32
  }
  func.func @transform_4(%arg0: i32) -> (i32, i32) {
    %c0_i32 = arith.constant 0 : i32
    %c0_i32_0 = arith.constant 0 : i32
    %c0_i32_1 = arith.constant 0 : i32
    return %c0_i32, %c0_i32_0 : i32, i32
  }
  func.func @transform_5(%arg0: i32) -> (i32, i32) {
    %c0_i32 = arith.constant 0 : i32
    %c0_i32_0 = arith.constant 0 : i32
    return %arg0, %c0_i32 : i32, i32
  }
}

</mosaic_0001>

<llo_original>
// kernel: tpu_custom_call.1
$region0: #{tpu_custom_call.1}
  #allocation0 [shape = 'u32[]', space=smem, size = 0x4, offset = 0x4, fixed_abs, tag = 'smem constant byte address 0x4 - core index']
  #allocation1 [shape = 'u32[144,128]{1,0:T(1,128)}', space=vmem, size = 0x12000, scoped, tag = 'internal scratch']
  #allocation2 [shape = 'f32[8,8,64]{2,1,0:T(8,128)}', space=vmem, size = 0x8000, scoped, tag = 'scratch operand']
  #allocation3 [shape = 'f32[8,64]{1,0:T(8,128)}', space=vmem, size = 0x1000, scoped, tag = 'scratch operand']
  %s0 = inlined_call_operand.hbm [shape: f32[24,8,40], index: 0, kind: input, shape index: {}]
  %s1 = inlined_call_operand.hbm [shape: f32[40,64], index: 1, kind: input, shape index: {}]
  %s2 = inlined_call_operand.hbm [shape: f32[64,64], index: 2, kind: input, shape index: {}]
  %s3 = inlined_call_operand.vmem [shape: f32[1,64], index: 3, kind: input, shape index: {}]
  %s4 = inlined_call_operand.vmem [shape: f32[1,64], index: 4, kind: input, shape index: {}]
  %s5 = inlined_call_operand.vmem [shape: f32[24,8], index: 5, kind: output, shape index: {}]
  %s6 = sld [smem:[#allocation0]]
  $region69: #{tpu_custom_call.1} parent=0
    _
  %s8 = ssub.s32 1, %s6
  %s9 = scalar_select 0, %s8, %s6
  $region1: #{tpu_custom_call.1} parent=0
    #allocation4 [shape = 'u8[65536]{0}', space=vmem, size = 0x10000, scoped, tag = 'input window, operand 0']
    #allocation5 [shape = 's32[2]{0}', space=sflag, size = 0x8, scoped, tag = 'scoped memory for tpu_custom_call.1']
    #allocation6 [shape = 'u8[20480]{0}', space=vmem, size = 0x5000, scoped, tag = 'input window, operand 1, single buffered']
    #allocation7 [shape = 's32[1]{0}', space=sflag, size = 0x4, scoped, tag = 'scoped memory for tpu_custom_call.1']
    #allocation8 [shape = 'u8[32768]{0}', space=vmem, size = 0x8000, scoped, tag = 'input window, operand 2, single buffered']
    %10 = vsyncpa [#allocation5], 0
    %s11 = scalar_lea.sflag [#allocation5], 1
    %12 = vsyncpa %s11, 0
    %13 = vsyncpa [#allocation7], 0
    loop: start=0, step=1, limit=5
    $region2: #{tpu_custom_call.1} parent=1 // loop_pre_header
      _
    $region3: #{tpu_custom_call.1} parent=1 // loop_header
      %s15 = sphi 0, %s19
      %p16 = scmp.ge.s32.totalorder %s15, 5
      %s25 = sphi 0, %s27
      %s28 = sphi 0, %s25
      %s29 = sphi 0, %s28
      %s45 = sphi 0, %s29
      %s49 = sphi 0, %s49
      %s51 = sphi 0, %s49
      %s52 = sphi 0, %s51
      %s66 = sphi 0, %s52
      %s70 = sphi 0, %s70
      %s72 = sphi 0, %s70
      %s73 = sphi 0, %s72
      %s87 = sphi 0, %s73
      %s91 = sphi 0, %s91
      %s93 = sphi 0, %s91
      %s94 = sphi 0, %s93
      %s108 = sphi 0, %s94
      %s112 = sphi 0, %s112
      %s114 = sphi 0, %s112
      %s115 = sphi 0, %s114
      %s129 = sphi 0, %s115
      %s135 = sphi 0, %s137
      %s138 = sphi 0, %s135
      %s139 = sphi 0, %s138
      %s155 = sphi 0, %s139
    $region4: #{tpu_custom_call.1} parent=1 // loop_header_branch
      %18 = sbr.rel (%p16) target = $region8
    $region5: #{tpu_custom_call.1} parent=1 // loop_body
      %s20 = ssub.s32 %s15, 1
      %s21 = ssub.s32 %s15, 2
      %s22 = sadd.s32 %s15, 1
      %s23 = ssub.s32 %s15, %s22
      %p24 = scmp.eq.s32.totalorder %s23, 0
      %s26 = sadd.s32 %s25, 1
      %s27 = scalar_select %p24, %s25, %s26
      %p30 = pneg %p24
      %p31 = scmp.eq.s32.totalorder %s15, 2
      %p32 = por %p30, %p31
      %p33 = scmp.ne.s32.totalorder %s25, %s28
      %p34 = scmp.eq.s32.totalorder %s15, 0
      %p35 = por %p33, %p34
      %p36 = scmp.ne.s32.totalorder %s25, %s28
      %p37 = scmp.eq.s32.totalorder %s20, 2
      %p38 = por %p36, %p37
      %p39 = scmp.ne.s32.totalorder %s28, %s29
      %p40 = scmp.eq.s32.totalorder %s20, 0
      %p41 = por %p39, %p40
      %p42 = scmp.ne.s32.totalorder %s28, %s29
      %p43 = scmp.eq.s32.totalorder %s21, 2
      %p44 = por %p42, %p43
      %p46 = scmp.ne.s32.totalorder %s29, %s45
      %p47 = scmp.eq.s32.totalorder %s21, 0
      %p48 = por %p46, %p47
      %s50 = sadd.s32 %s49, 1
      %p53 = scmp.eq.s32.totalorder %s15, 2
      %p54 = scmp.ne.s32.totalorder %s49, %s51
      %p55 = scmp.eq.s32.totalorder %s15, 0
      %p56 = por %p54, %p55
      %p57 = scmp.ne.s32.totalorder %s49, %s51
      %p58 = scmp.eq.s32.totalorder %s20, 2
      %p59 = por %p57, %p58
      %p60 = scmp.ne.s32.totalorder %s51, %s52
      %p61 = scmp.eq.s32.totalorder %s20, 0
      %p62 = por %p60, %p61
      %p63 = scmp.ne.s32.totalorder %s51, %s52
      %p64 = scmp.eq.s32.totalorder %s21, 2
      %p65 = por %p63, %p64
      %p67 = scmp.ne.s32.totalorder %s52, %s66
      %p68 = scmp.eq.s32.totalorder %s21, 0
      %p69 = por %p67, %p68
      %s71 = sadd.s32 %s70, 1
      %p74 = scmp.eq.s32.totalorder %s15, 2
      %p75 = scmp.ne.s32.totalorder %s70, %s72
      %p76 = scmp.eq.s32.totalorder %s15, 0
      %p77 = por %p75, %p76
      %p78 = scmp.ne.s32.totalorder %s70, %s72
      %p79 = scmp.eq.s32.totalorder %s20, 2
      %p80 = por %p78, %p79
      %p81 = scmp.ne.s32.totalorder %s72, %s73
      %p82 = scmp.eq.s32.totalorder %s20, 0
      %p83 = por %p81, %p82
      %p84 = scmp.ne.s32.totalorder %s72, %s73
      %p85 = scmp.eq.s32.totalorder %s21, 2
      %p86 = por %p84, %p85
      %p88 = scmp.ne.s32.totalorder %s73, %s87
      %p89 = scmp.eq.s32.totalorder %s21, 0
      %p90 = por %p88, %p89
      %s92 = sadd.s32 %s91, 1
      %p95 = scmp.eq.s32.totalorder %s15, 2
      %p96 = scmp.ne.s32.totalorder %s91, %s93
      %p97 = scmp.eq.s32.totalorder %s15, 0
      %p98 = por %p96, %p97
      %p99 = scmp.ne.s32.totalorder %s91, %s93
      %p100 = scmp.eq.s32.totalorder %s20, 2
      %p101 = por %p99, %p100
      %p102 = scmp.ne.s32.totalorder %s93, %s94
      %p103 = scmp.eq.s32.totalorder %s20, 0
      %p104 = por %p102, %p103
      %p105 = scmp.ne.s32.totalorder %s93, %s94
      %p106 = scmp.eq.s32.totalorder %s21, 2
      %p107 = por %p105, %p106
      %p109 = scmp.ne.s32.totalorder %s94, %s108
      %p110 = scmp.eq.s32.totalorder %s21, 0
      %p111 = por %p109, %p110
      %s113 = sadd.s32 %s112, 1
      %p116 = scmp.eq.s32.totalorder %s15, 2
      %p117 = scmp.ne.s32.totalorder %s112, %s114
      %p118 = scmp.eq.s32.totalorder %s15, 0
      %p119 = por %p117, %p118
      %p120 = scmp.ne.s32.totalorder %s112, %s114
      %p121 = scmp.eq.s32.totalorder %s20, 2
      %p122 = por %p120, %p121
      %p123 = scmp.ne.s32.totalorder %s114, %s115
      %p124 = scmp.eq.s32.totalorder %s20, 0
      %p125 = por %p123, %p124
      %p126 = scmp.ne.s32.totalorder %s114, %s115
      %p127 = scmp.eq.s32.totalorder %s21, 2
      %p128 = por %p126, %p127
      %p130 = scmp.ne.s32.totalorder %s115, %s129
      %p131 = scmp.eq.s32.totalorder %s21, 0
      %p132 = por %p130, %p131
      %s133 = ssub.s32 %s15, %s22
      %p134 = scmp.eq.s32.totalorder %s133, 0
      %s136 = sadd.s32 %s135, 1
      %s137 = scalar_select %p134, %s135, %s136
      %p140 = pneg %p134
      %p141 = scmp.eq.s32.totalorder %s15, 2
      %p142 = por %p140, %p141
      %p143 = scmp.ne.s32.totalorder %s135, %s138
      %p144 = scmp.eq.s32.totalorder %s15, 0
      %p145 = por %p143, %p144
      %p146 = scmp.ne.s32.totalorder %s135, %s138
      %p147 = scmp.eq.s32.totalorder %s20, 2
      %p148 = por %p146, %p147
      %p149 = scmp.ne.s32.totalorder %s138, %s139
      %p150 = scmp.eq.s32.totalorder %s20, 0
      %p151 = por %p149, %p150
      %p152 = scmp.ne.s32.totalorder %s138, %s139
      %p153 = scmp.eq.s32.totalorder %s21, 2
      %p154 = por %p152, %p153
      %p156 = scmp.ne.s32.totalorder %s139, %s155
      %p157 = scmp.eq.s32.totalorder %s21, 0
      %p158 = por %p156, %p157
      %p159 = scmp.le.s32.totalorder 1, %s15
      %p160 = scmp.lt.s32.totalorder %s15, 4
      %p161 = pnand %p159, %p160
      %p162 = pneg %p161
      // Predicated region
      $region9: #{tpu_custom_call.1} parent=5 // pred_check
        _
      $region10: #{tpu_custom_call.1} parent=5 // pred_check_branch
        %164 = sbr.rel (%p161) target = $region12
      $region11: #{tpu_custom_call.1} parent=5 // pred_region
        %s165 = ssub.s32 %s15, 1
        // Predicated region
        $region13: #{tpu_custom_call.1} parent=11 // pred_check
          %p166 = pneg %p62
        $region14: #{tpu_custom_call.1} parent=11 // pred_check_branch
          %168 = sbr.rel (%p166) target = $region16
        $region15: #{tpu_custom_call.1} parent=11 // pred_region
          %s170 = ssub.s32 640, 640
          %171 = vsyncadd [#allocation7], %s170
          %s172 = sshll.u32 [#allocation6], 4
          %s173 = int_to_ptr.vmem [resolvable:$true] %s172
          %178 = dma.hbm_to_vmem [thread:$0]  %s1, 640, %s173, [#allocation7], 128, 128, 8
        $region16: #{tpu_custom_call.1} parent=11 // pred_fallthru
          _
        // Predicated region
        $region17: #{tpu_custom_call.1} parent=11 // pred_check
          %p179 = pneg %p83
        $region18: #{tpu_custom_call.1} parent=11 // pred_check_branch
          %181 = sbr.rel (%p179) target = $region20
        $region19: #{tpu_custom_call.1} parent=11 // pred_region
          %s183 = ssub.s32 1024, 1024
          %184 = vsyncadd [#allocation7], %s183
          %s185 = sshll.u32 [#allocation8], 4
          %s186 = int_to_ptr.vmem [resolvable:$true] %s185
          %191 = dma.hbm_to_vmem [thread:$0]  %s2, 1024, %s186, [#allocation7], 128, 128, 8
        $region20: #{tpu_custom_call.1} parent=11 // pred_fallthru
          _
        // Predicated region
        $region21: #{tpu_custom_call.1} parent=11 // pred_check
          %p192 = pneg %p104
        $region22: #{tpu_custom_call.1} parent=11 // pred_check_branch
          %194 = sbr.rel (%p192) target = $region24
        $region23: #{tpu_custom_call.1} parent=11 // pred_region
          _
        $region24: #{tpu_custom_call.1} parent=11 // pred_fallthru
          _
        // Predicated region
        $region25: #{tpu_custom_call.1} parent=11 // pred_check
          %p195 = pneg %p125
        $region26: #{tpu_custom_call.1} parent=11 // pred_check_branch
          %197 = sbr.rel (%p195) target = $region28
        $region27: #{tpu_custom_call.1} parent=11 // pred_region
          _
        $region28: #{tpu_custom_call.1} parent=11 // pred_fallthru
          _
      $region12: #{tpu_custom_call.1} parent=5 // pred_fallthru
        _
      %p198 = scmp.lt.s32.totalorder %s15, 3
      // Predicated region
      $region29: #{tpu_custom_call.1} parent=5 // pred_check
        %p199 = pneg %p198
      $region30: #{tpu_custom_call.1} parent=5 // pred_check_branch
        %201 = sbr.rel (%p199) target = $region32
      $region31: #{tpu_custom_call.1} parent=5 // pred_region
        // Predicated region
        $region33: #{tpu_custom_call.1} parent=31 // pred_check
          %p202 = pneg %p35
        $region34: #{tpu_custom_call.1} parent=31 // pred_check_branch
          %204 = sbr.rel (%p202) target = $region36
        $region35: #{tpu_custom_call.1} parent=31 // pred_region
          %s205 = sand.u32 %s25, 1
          %s206 = scalar_lea.sflag [#allocation5], %s205
          %s207 = sand.u32 %s25, 1
          %s208 = smul.addr %s207, 64
          %s209 = scalar_lea.vmem [#allocation4], %s208
          %s210 = smul.u32 8, %s15
          %s212 = ssub.s32 1024, 1024
          %213 = vsyncadd %s206, %s212
          %s214 = smul.addr %s210, 128
          %s215 = scalar_lea.hbm %s0, %s214
          %s216 = sshll.u32 %s209, 4
          %s217 = int_to_ptr.vmem [resolvable:$true] %s216
          %222 = dma.hbm_to_vmem [thread:$0]  %s215, 1024, %s217, %s206, 128, 128, 8
        $region36: #{tpu_custom_call.1} parent=31 // pred_fallthru
          _
      $region32: #{tpu_custom_call.1} parent=5 // pred_fallthru
        _
      %p223 = scmp.le.s32.totalorder 1, %s15
      %p224 = scmp.lt.s32.totalorder %s15, 4
      %p225 = pnand %p223, %p224
      %p226 = pneg %p225
      // Predicated region
      $region37: #{tpu_custom_call.1} parent=5 // pred_check
        _
      $region38: #{tpu_custom_call.1} parent=5 // pred_check_branch
        %228 = sbr.rel (%p225) target = $region40
      $region39: #{tpu_custom_call.1} parent=5 // pred_region
        %s229 = ssub.s32 %s15, 1
        %s230 = sand.u32 %s28, 1
        %s231 = scalar_lea.sflag [#allocation5], %s230
        %s232 = sand.u32 %s28, 1
        %s233 = smul.addr %s232, 64
        %s234 = scalar_lea.vmem [#allocation4], %s233
        // Predicated region
        $region41: #{tpu_custom_call.1} parent=39 // pred_check
          %p235 = pneg %p41
        $region42: #{tpu_custom_call.1} parent=39 // pred_check_branch
          %237 = sbr.rel (%p235) target = $region44
        $region43: #{tpu_custom_call.1} parent=39 // pred_region
          %238 = dma.done %s231, 1024
        $region44: #{tpu_custom_call.1} parent=39 // pred_fallthru
          _
        // Predicated region
        $region45: #{tpu_custom_call.1} parent=39 // pred_check
          %p239 = pneg %p62
        $region46: #{tpu_custom_call.1} parent=39 // pred_check_branch
          %241 = sbr.rel (%p239) target = $region48
        $region47: #{tpu_custom_call.1} parent=39 // pred_region
          %242 = dma.done [#allocation7], 640
        $region48: #{tpu_custom_call.1} parent=39 // pred_fallthru
          _
        // Predicated region
        $region49: #{tpu_custom_call.1} parent=39 // pred_check
          %p243 = pneg %p83
        $region50: #{tpu_custom_call.1} parent=39 // pred_check_branch
          %245 = sbr.rel (%p243) target = $region52
        $region51: #{tpu_custom_call.1} parent=39 // pred_region
          %246 = dma.done [#allocation7], 1024
        $region52: #{tpu_custom_call.1} parent=39 // pred_fallthru
          _
        %s247 = sand.u32 %s28, 1
        %s248 = scalar_lea.sflag [#allocation5], %s247
        %s249 = sand.u32 %s28, 1
        %s250 = smul.addr %s249, 64
        %s251 = scalar_lea.vmem [#allocation4], %s250
        %p252 = pneg %p41
        %p253 = pneg %p38
        %p254 = pneg %p62
        %p255 = pneg %p59
        %p256 = pneg %p83
        %p257 = pneg %p80
        %p258 = pneg %p104
        %p259 = pneg %p101
        %p260 = pneg %p125
        %p261 = pneg %p122
        %p262 = pneg %p151
        %p263 = pneg %p148
        %p264 = scmp.lt.s32.totalorder %s20, 2
        %s265 = scalar_select %p264, %s20, 2
        %s266 = smul.addr %s265, 8
        %s267 = scalar_lea.vmem %s5, %s266
        %s268 = smul.u32 8, %s20
        %p269 = scmp.lt.s32.totalorder %s20, 2
        %s270 = scalar_select %p269, %s20, 2
        %s271 = smul.addr %s270, 8
        %s272 = scalar_lea.vmem %s5, %s271
        %p273 = scmp.eq.s32.totalorder %s20, 0
        // Predicated region
        $region53: #{tpu_custom_call.1} parent=39 // pred_check
          %p274 = pneg %p273
        $region54: #{tpu_custom_call.1} parent=39 // pred_check_branch
          %276 = sbr.rel (%p274) target = $region56
        $region55: #{tpu_custom_call.1} parent=39 // pred_region
          %vm277 = vcmask 523264
          %278 = vst.msk [vmem:[#allocation3] sm:$0xff] %vm277, 0.0
        $region56: #{tpu_custom_call.1} parent=39 // pred_fallthru
          _
        %v279 = vld [vmem:[%s234] sm:$0xff]
        %v280 = vld [vmem:[%s234 + $0x8] sm:$0xff]
        %v281 = vld [vmem:[%s234 + $0x10] sm:$0xff]
        %v282 = vld [vmem:[%s234 + $0x18] sm:$0xff]
        %v283 = vld [vmem:[%s234 + $0x20] sm:$0xff]
        %v284 = vld [vmem:[%s234 + $0x28] sm:$0xff]
        %v285 = vld [vmem:[%s234 + $0x30] sm:$0xff]
        %v286 = vld [vmem:[%s234 + $0x38] sm:$0xff]
        %v287 = vld [vmem:[#allocation6] sm:$0xff]
        %v288 = vld [vmem:[#allocation6 + $0x8] sm:$0xff]
        %v289 = vld [vmem:[#allocation6 + $0x10] sm:$0xff]
        %v290 = vld [vmem:[#allocation6 + $0x18] sm:$0xff]
        %v291 = vld [vmem:[#allocation6 + $0x20] sm:$0xff]
        %v292 = vld [vmem:[%s3] sm:$0x1]
        %v294 = vlaneseq
        %v295 = vshrl.u32 %v294, 7
        %v296 = vsub.s32 0, %v295
        %v297 = vrot.slane %v292, %v296
        %vm299 = vcmask 326656
        %v301 = vsel %vm299, %v279, 0
        %v304 = vsel %vm299, %v280, 0
        %v307 = vsel %vm299, %v281, 0
        %v310 = vsel %vm299, %v282, 0
        %v313 = vsel %vm299, %v283, 0
        %v316 = vsel %vm299, %v284, 0
        %v319 = vsel %vm299, %v285, 0
        %v322 = vsel %vm299, %v286, 0
        %324 = vmatprep.subr.mxu0 0.0
        %325 = vmatpush1.msra.mxu0 %v287
        %326 = vmatprep.subr.mxu0 0.0
        %327 = vmatpush1.msra.mxu0 %v288
        %328 = vmatprep.subr.mxu0 0.0
        %329 = vmatpush1.msra.mxu0 %v289
        %330 = vmatprep.subr.mxu0 0.0
        %331 = vmatpush1.msra.mxu0 %v290
        %332 = vmatprep.subr.mxu0 0.0
        %333 = vmatpush1.msra.mxu0 %v291
        %334 = vmatprep.subr.mxu0 0.0
        %335 = vmatpush1.msra.mxu0 0.0
        %336 = vmatprep.subr.mxu0 0.0
        %337 = vmatpush1.msra.mxu0 0.0
        %338 = vmatprep.subr.mxu0 0.0
        %339 = vmatpush1.msra.mxu0 0.0
        %340 = vmatprep.subr.mxu0 0.0
        %341 = vmatpush1.msra.mxu0 0.0
        %342 = vmatprep.subr.mxu0 0.0
        %343 = vmatpush1.msra.mxu0 0.0
        %344 = vmatprep.subr.mxu0 0.0
        %345 = vmatpush1.msra.mxu0 0.0
        %346 = vmatprep.subr.mxu0 0.0
        %347 = vmatpush1.msra.mxu0 0.0
        %348 = vmatprep.subr.mxu0 0.0
        %349 = vmatpush1.msra.mxu0 0.0
        %350 = vmatprep.subr.mxu0 0.0
        %351 = vmatpush1.msra.mxu0 0.0
        %352 = vmatprep.subr.mxu0 0.0
        %353 = vmatpush1.msra.mxu0 0.0
        %354 = vmatprep.subr.mxu0 0.0
        %355 = vmatpush1.msra.mxu0 0.0
        %356 = vmatprep.subr.mxu0 0.0
        %357 = vmatpush1.msra.mxu0 0.0
        %358 = vmatprep.subr.mxu0 0.0
        %359 = vmatpush1.msra.mxu0 0.0
        %360 = vmatprep.subr.mxu0 0.0
        %361 = vmatpush1.msra.mxu0 0.0
        %362 = vmatprep.subr.mxu0 0.0
        %363 = vmatpush1.msra.mxu0 0.0
        %364 = vmatprep.subr.mxu0 0.0
        %365 = vmatpush1.msra.mxu0 0.0
        %366 = vmatprep.subr.mxu0 0.0
        %367 = vmatpush1.msra.mxu0 0.0
        %368 = vmatprep.subr.mxu0 0.0
        %369 = vmatpush1.msra.mxu0 0.0
        %370 = vmatprep.subr.mxu0 0.0
        %371 = vmatpush1.msra.mxu0 0.0
        %372 = vmatprep.subr.mxu0 0.0
        %373 = vmatpush1.msra.mxu0 0.0
        %374 = vmatprep.subr.mxu0 0.0
        %375 = vmatpush1.msra.mxu0 0.0
        %376 = vmatprep.subr.mxu0 0.0
        %377 = vmatpush1.msra.mxu0 0.0
        %378 = vmatprep.subr.mxu0 0.0
        %379 = vmatpush1.msra.mxu0 0.0
        %380 = vmatprep.subr.mxu0 0.0
        %381 = vmatpush1.msra.mxu0 0.0
        %382 = vmatprep.subr.mxu0 0.0
        %383 = vmatpush1.msra.mxu0 0.0
        %384 = vmatprep.subr.mxu0 0.0
        %385 = vmatpush1.msra.mxu0 0.0
        %386 = vmatprep.subr.mxu0 0.0
        %387 = vmatpush1.msra.mxu0 0.0
        %388 = vmatprep.mubr.f32.mxu0 0.0
        %389 = vmatmul.mubr.f32.gmra.mrb[0].mxu0 %v301
        %v390 = vpop.f32.mrb[0].mxu0
        %v391 = vadd.f32 %v297, %v390
        %v392 = vpop.f32.mrb[0].mxu0
        %393 = vmatprep.mubr.f32.mxu0 0.0
        %394 = vmatmul.mubr.f32.gmra.mrb[0].mxu0 %v304
        %v395 = vpop.f32.mrb[0].mxu0
        %v396 = vadd.f32 %v297, %v395
        %v397 = vpop.f32.mrb[0].mxu0
        %398 = vmatprep.mubr.f32.mxu0 0.0
        %399 = vmatmul.mubr.f32.gmra.mrb[0].mxu0 %v307
        %v400 = vpop.f32.mrb[0].mxu0
        %v401 = vadd.f32 %v297, %v400
        %v402 = vpop.f32.mrb[0].mxu0
        %403 = vmatprep.mubr.f32.mxu0 0.0
        %404 = vmatmul.mubr.f32.gmra.mrb[0].mxu0 %v310
        %v405 = vpop.f32.mrb[0].mxu0
        %v406 = vadd.f32 %v297, %v405
        %v407 = vpop.f32.mrb[0].mxu0
        %408 = vmatprep.mubr.f32.mxu0 0.0
        %409 = vmatmul.mubr.f32.gmra.mrb[0].mxu0 %v313
        %v410 = vpop.f32.mrb[0].mxu0
        %v411 = vadd.f32 %v297, %v410
        %v412 = vpop.f32.mrb[0].mxu0
        %413 = vmatprep.mubr.f32.mxu0 0.0
        %414 = vmatmul.mubr.f32.gmra.mrb[0].mxu0 %v316
        %v415 = vpop.f32.mrb[0].mxu0
        %v416 = vadd.f32 %v297, %v415
        %v417 = vpop.f32.mrb[0].mxu0
        %418 = vmatprep.mubr.f32.mxu0 0.0
        %419 = vmatmul.mubr.f32.gmra.mrb[0].mxu0 %v319
        %v420 = vpop.f32.mrb[0].mxu0
        %v421 = vadd.f32 %v297, %v420
        %v422 = vpop.f32.mrb[0].mxu0
        %423 = vmatprep.mubr.f32.mxu0 0.0
        %424 = vmatmul.mubr.f32.gmra.mrb[0].mxu0 %v322
        %v425 = vpop.f32.mrb[0].mxu0
        %v426 = vadd.f32 %v297, %v425
        %v427 = vpop.f32.mrb[0].mxu0
        %428 = vdwg.mxu0
        %vm429 = vcmask 523264
        %430 = vst.msk [vmem:[#allocation2] sm:$0xff] %vm429, %v391
        %431 = vst.msk [vmem:[#allocation2 + $0x8] sm:$0xff] %vm429, %v396
        %432 = vst.msk [vmem:[#allocation2 + $0x10] sm:$0xff] %vm429, %v401
        %433 = vst.msk [vmem:[#allocation2 + $0x18] sm:$0xff] %vm429, %v406
        %434 = vst.msk [vmem:[#allocation2 + $0x20] sm:$0xff] %vm429, %v411
        %435 = vst.msk [vmem:[#allocation2 + $0x28] sm:$0xff] %vm429, %v416
        %436 = vst.msk [vmem:[#allocation2 + $0x30] sm:$0xff] %vm429, %v421
        %437 = vst.msk [vmem:[#allocation2 + $0x38] sm:$0xff] %vm429, %v426
        %v438 = vld [vmem:[#allocation8] sm:$0xff]
        %v439 = vld [vmem:[#allocation8 + $0x8] sm:$0xff]
        %v440 = vld [vmem:[#allocation8 + $0x10] sm:$0xff]
        %v441 = vld [vmem:[#allocation8 + $0x18] sm:$0xff]
        %v442 = vld [vmem:[#allocation8 + $0x20] sm:$0xff]
        %v443 = vld [vmem:[#allocation8 + $0x28] sm:$0xff]
        %v444 = vld [vmem:[#allocation8 + $0x30] sm:$0xff]
        %v445 = vld [vmem:[#allocation8 + $0x38] sm:$0xff]
        %v446 = vld [vmem:[#allocation3] sm:$0xff]
        %v447 = vld [vmem:[#allocation2] sm:$0xff]
        %v449 = vsel %vm429, %v446, 0
        %451 = vmatprep.subr.mxu0 0.0
        %452 = vmatpush1.msra.mxu0 %v438
        %453 = vmatprep.subr.mxu0 0.0
        %454 = vmatpush1.msra.mxu0 %v439
        %455 = vmatprep.subr.mxu0 0.0
        %456 = vmatpush1.msra.mxu0 %v440
        %457 = vmatprep.subr.mxu0 0.0
        %458 = vmatpush1.msra.mxu0 %v441
        %459 = vmatprep.subr.mxu0 0.0
        %460 = vmatpush1.msra.mxu0 %v442
        %461 = vmatprep.subr.mxu0 0.0
        %462 = vmatpush1.msra.mxu0 %v443
        %463 = vmatprep.subr.mxu0 0.0
        %464 = vmatpush1.msra.mxu0 %v444
        %465 = vmatprep.subr.mxu0 0.0
        %466 = vmatpush1.msra.mxu0 %v445
        %467 = vmatprep.subr.mxu0 0.0
        %468 = vmatpush1.msra.mxu0 0.0
        %469 = vmatprep.subr.mxu0 0.0
        %470 = vmatpush1.msra.mxu0 0.0
        %471 = vmatprep.subr.mxu0 0.0
        %472 = vmatpush1.msra.mxu0 0.0
        %473 = vmatprep.subr.mxu0 0.0
        %474 = vmatpush1.msra.mxu0 0.0
        %475 = vmatprep.subr.mxu0 0.0
        %476 = vmatpush1.msra.mxu0 0.0
        %477 = vmatprep.subr.mxu0 0.0
        %478 = vmatpush1.msra.mxu0 0.0
        %479 = vmatprep.subr.mxu0 0.0
        %480 = vmatpush1.msra.mxu0 0.0
        %481 = vmatprep.subr.mxu0 0.0
        %482 = vmatpush1.msra.mxu0 0.0
        %483 = vmatprep.subr.mxu0 0.0
        %484 = vmatpush1.msra.mxu0 0.0
        %485 = vmatprep.subr.mxu0 0.0
        %486 = vmatpush1.msra.mxu0 0.0
        %487 = vmatprep.subr.mxu0 0.0
        %488 = vmatpush1.msra.mxu0 0.0
        %489 = vmatprep.subr.mxu0 0.0
        %490 = vmatpush1.msra.mxu0 0.0
        %491 = vmatprep.subr.mxu0 0.0
        %492 = vmatpush1.msra.mxu0 0.0
        %493 = vmatprep.subr.mxu0 0.0
        %494 = vmatpush1.msra.mxu0 0.0
        %495 = vmatprep.subr.mxu0 0.0
        %496 = vmatpush1.msra.mxu0 0.0
        %497 = vmatprep.subr.mxu0 0.0
        %498 = vmatpush1.msra.mxu0 0.0
        %499 = vmatprep.subr.mxu0 0.0
        %500 = vmatpush1.msra.mxu0 0.0
        %501 = vmatprep.subr.mxu0 0.0
        %502 = vmatpush1.msra.mxu0 0.0
        %503 = vmatprep.subr.mxu0 0.0
        %504 = vmatpush1.msra.mxu0 0.0
        %505 = vmatprep.subr.mxu0 0.0
        %506 = vmatpush1.msra.mxu0 0.0
        %507 = vmatprep.subr.mxu0 0.0
        %508 = vmatpush1.msra.mxu0 0.0
        %509 = vmatprep.subr.mxu0 0.0
        %510 = vmatpush1.msra.mxu0 0.0
        %511 = vmatprep.subr.mxu0 0.0
        %512 = vmatpush1.msra.mxu0 0.0
        %513 = vmatprep.subr.mxu0 0.0
        %514 = vmatpush1.msra.mxu0 0.0
        %515 = vmatprep.mubr.f32.mxu0 0.0
        %516 = vmatmul.mubr.f32.gmra.mrb[0].mxu0 %v449
        %v517 = vpop.f32.mrb[0].mxu0
        %v518 = vadd.f32 0.0, %v517
        %v519 = vpop.f32.mrb[0].mxu0
        %520 = vdwg.mxu0
        %v521 = vadd.f32 %v447, %v518
        %v522 = vtanh.pop %v521
        %523 = vst.msk [vmem:[#allocation2] sm:$0xff] %vm429, %v522
        %s524 = scalar_lea.vmem [#allocation2], 8
        %v525 = vld [vmem:[%s524] sm:$0xff]
        %v527 = vsel %vm429, %v522, 0
        %529 = vmatprep.subr.mxu0 0.0
        %530 = vmatpush1.msra.mxu0 %v438
        %531 = vmatprep.subr.mxu0 0.0
        %532 = vmatpush1.msra.mxu0 %v439
        %533 = vmatprep.subr.mxu0 0.0
        %534 = vmatpush1.msra.mxu0 %v440
        %535 = vmatprep.subr.mxu0 0.0
        %536 = vmatpush1.msra.mxu0 %v441
        %537 = vmatprep.subr.mxu0 0.0
        %538 = vmatpush1.msra.mxu0 %v442
        %539 = vmatprep.subr.mxu0 0.0
        %540 = vmatpush1.msra.mxu0 %v443
        %541 = vmatprep.subr.mxu0 0.0
        %542 = vmatpush1.msra.mxu0 %v444
        %543 = vmatprep.subr.mxu0 0.0
        %544 = vmatpush1.msra.mxu0 %v445
        %545 = vmatprep.subr.mxu0 0.0
        %546 = vmatpush1.msra.mxu0 0.0
        %547 = vmatprep.subr.mxu0 0.0
        %548 = vmatpush1.msra.mxu0 0.0
        %549 = vmatprep.subr.mxu0 0.0
        %550 = vmatpush1.msra.mxu0 0.0
        %551 = vmatprep.subr.mxu0 0.0
        %552 = vmatpush1.msra.mxu0 0.0
        %553 = vmatprep.subr.mxu0 0.0
        %554 = vmatpush1.msra.mxu0 0.0
        %555 = vmatprep.subr.mxu0 0.0
        %556 = vmatpush1.msra.mxu0 0.0
        %557 = vmatprep.subr.mxu0 0.0
        %558 = vmatpush1.msra.mxu0 0.0
        %559 = vmatprep.subr.mxu0 0.0
        %560 = vmatpush1.msra.mxu0 0.0
        %561 = vmatprep.subr.mxu0 0.0
        %562 = vmatpush1.msra.mxu0 0.0
        %563 = vmatprep.subr.mxu0 0.0
        %564 = vmatpush1.msra.mxu0 0.0
        %565 = vmatprep.subr.mxu0 0.0
        %566 = vmatpush1.msra.mxu0 0.0
        %567 = vmatprep.subr.mxu0 0.0
        %568 = vmatpush1.msra.mxu0 0.0
        %569 = vmatprep.subr.mxu0 0.0
        %570 = vmatpush1.msra.mxu0 0.0
        %571 = vmatprep.subr.mxu0 0.0
        %572 = vmatpush1.msra.mxu0 0.0
        %573 = vmatprep.subr.mxu0 0.0
        %574 = vmatpush1.msra.mxu0 0.0
        %575 = vmatprep.subr.mxu0 0.0
        %576 = vmatpush1.msra.mxu0 0.0
        %577 = vmatprep.subr.mxu0 0.0
        %578 = vmatpush1.msra.mxu0 0.0
        %579 = vmatprep.subr.mxu0 0.0
        %580 = vmatpush1.msra.mxu0 0.0
        %581 = vmatprep.subr.mxu0 0.0
        %582 = vmatpush1.msra.mxu0 0.0
        %583 = vmatprep.subr.mxu0 0.0
        %584 = vmatpush1.msra.mxu0 0.0
        %585 = vmatprep.subr.mxu0 0.0
        %586 = vmatpush1.msra.mxu0 0.0
        %587 = vmatprep.subr.mxu0 0.0
        %588 = vmatpush1.msra.mxu0 0.0
        %589 = vmatprep.subr.mxu0 0.0
        %590 = vmatpush1.msra.mxu0 0.0
        %591 = vmatprep.subr.mxu0 0.0
        %592 = vmatpush1.msra.mxu0 0.0
        %593 = vmatprep.mubr.f32.mxu0 0.0
        %594 = vmatmul.mubr.f32.gmra.mrb[0].mxu0 %v527
        %v595 = vpop.f32.mrb[0].mxu0
        %v596 = vadd.f32 0.0, %v595
        %v597 = vpop.f32.mrb[0].mxu0
        %598 = vdwg.mxu0
        %v599 = vadd.f32 %v525, %v596
        %v600 = vtanh.pop %v599
        %601 = vst.msk [vmem:[%s524] sm:$0xff] %vm429, %v600
        %s602 = scalar_lea.vmem [#allocation2], 16
        %v603 = vld [vmem:[%s602] sm:$0xff]
        %v605 = vsel %vm429, %v600, 0
        %607 = vmatprep.subr.mxu0 0.0
        %608 = vmatpush1.msra.mxu0 %v438
        %609 = vmatprep.subr.mxu0 0.0
        %610 = vmatpush1.msra.mxu0 %v439
        %611 = vmatprep.subr.mxu0 0.0
        %612 = vmatpush1.msra.mxu0 %v440
        %613 = vmatprep.subr.mxu0 0.0
        %614 = vmatpush1.msra.mxu0 %v441
        %615 = vmatprep.subr.mxu0 0.0
        %616 = vmatpush1.msra.mxu0 %v442
        %617 = vmatprep.subr.mxu0 0.0
        %618 = vmatpush1.msra.mxu0 %v443
        %619 = vmatprep.subr.mxu0 0.0
        %620 = vmatpush1.msra.mxu0 %v444
        %621 = vmatprep.subr.mxu0 0.0
        %622 = vmatpush1.msra.mxu0 %v445
        %623 = vmatprep.subr.mxu0 0.0
        %624 = vmatpush1.msra.mxu0 0.0
        %625 = vmatprep.subr.mxu0 0.0
        %626 = vmatpush1.msra.mxu0 0.0
        %627 = vmatprep.subr.mxu0 0.0
        %628 = vmatpush1.msra.mxu0 0.0
        %629 = vmatprep.subr.mxu0 0.0
        %630 = vmatpush1.msra.mxu0 0.0
        %631 = vmatprep.subr.mxu0 0.0
        %632 = vmatpush1.msra.mxu0 0.0
        %633 = vmatprep.subr.mxu0 0.0
        %634 = vmatpush1.msra.mxu0 0.0
        %635 = vmatprep.subr.mxu0 0.0
        %636 = vmatpush1.msra.mxu0 0.0
        %637 = vmatprep.subr.mxu0 0.0
        %638 = vmatpush1.msra.mxu0 0.0
        %639 = vmatprep.subr.mxu0 0.0
        %640 = vmatpush1.msra.mxu0 0.0
        %641 = vmatprep.subr.mxu0 0.0
        %642 = vmatpush1.msra.mxu0 0.0
        %643 = vmatprep.subr.mxu0 0.0
        %644 = vmatpush1.msra.mxu0 0.0
        %645 = vmatprep.subr.mxu0 0.0
        %646 = vmatpush1.msra.mxu0 0.0
        %647 = vmatprep.subr.mxu0 0.0
        %648 = vmatpush1.msra.mxu0 0.0
        %649 = vmatprep.subr.mxu0 0.0
        %650 = vmatpush1.msra.mxu0 0.0
        %651 = vmatprep.subr.mxu0 0.0
        %652 = vmatpush1.msra.mxu0 0.0
        %653 = vmatprep.subr.mxu0 0.0
        %654 = vmatpush1.msra.mxu0 0.0
        %655 = vmatprep.subr.mxu0 0.0
        %656 = vmatpush1.msra.mxu0 0.0
        %657 = vmatprep.subr.mxu0 0.0
        %658 = vmatpush1.msra.mxu0 0.0
        %659 = vmatprep.subr.mxu0 0.0
        %660 = vmatpush1.msra.mxu0 0.0
        %661 = vmatprep.subr.mxu0 0.0
        %662 = vmatpush1.msra.mxu0 0.0
        %663 = vmatprep.subr.mxu0 0.0
        %664 = vmatpush1.msra.mxu0 0.0
        %665 = vmatprep.subr.mxu0 0.0
        %666 = vmatpush1.msra.mxu0 0.0
        %667 = vmatprep.subr.mxu0 0.0
        %668 = vmatpush1.msra.mxu0 0.0
        %669 = vmatprep.subr.mxu0 0.0
        %670 = vmatpush1.msra.mxu0 0.0
        %671 = vmatprep.mubr.f32.mxu0 0.0
        %672 = vmatmul.mubr.f32.gmra.mrb[0].mxu0 %v605
        %v673 = vpop.f32.mrb[0].mxu0
        %v674 = vadd.f32 0.0, %v673
        %v675 = vpop.f32.mrb[0].mxu0
        %676 = vdwg.mxu0
        %v677 = vadd.f32 %v603, %v674
        %v678 = vtanh.pop %v677
        %679 = vst.msk [vmem:[%s602] sm:$0xff] %vm429, %v678
        %s680 = scalar_lea.vmem [#allocation2], 24
        %v681 = vld [vmem:[%s680] sm:$0xff]
        %v683 = vsel %vm429, %v678, 0
        %685 = vmatprep.subr.mxu0 0.0
        %686 = vmatpush1.msra.mxu0 %v438
        %687 = vmatprep.subr.mxu0 0.0
        %688 = vmatpush1.msra.mxu0 %v439
        %689 = vmatprep.subr.mxu0 0.0
        %690 = vmatpush1.msra.mxu0 %v440
        %691 = vmatprep.subr.mxu0 0.0
        %692 = vmatpush1.msra.mxu0 %v441
        %693 = vmatprep.subr.mxu0 0.0
        %694 = vmatpush1.msra.mxu0 %v442
        %695 = vmatprep.subr.mxu0 0.0
        %696 = vmatpush1.msra.mxu0 %v443
        %697 = vmatprep.subr.mxu0 0.0
        %698 = vmatpush1.msra.mxu0 %v444
        %699 = vmatprep.subr.mxu0 0.0
        %700 = vmatpush1.msra.mxu0 %v445
        %701 = vmatprep.subr.mxu0 0.0
        %702 = vmatpush1.msra.mxu0 0.0
        %703 = vmatprep.subr.mxu0 0.0
        %704 = vmatpush1.msra.mxu0 0.0
        %705 = vmatprep.subr.mxu0 0.0
        %706 = vmatpush1.msra.mxu0 0.0
        %707 = vmatprep.subr.mxu0 0.0
        %708 = vmatpush1.msra.mxu0 0.0
        %709 = vmatprep.subr.mxu0 0.0
        %710 = vmatpush1.msra.mxu0 0.0
        %711 = vmatprep.subr.mxu0 0.0
        %712 = vmatpush1.msra.mxu0 0.0
        %713 = vmatprep.subr.mxu0 0.0
        %714 = vmatpush1.msra.mxu0 0.0
        %715 = vmatprep.subr.mxu0 0.0
        %716 = vmatpush1.msra.mxu0 0.0
        %717 = vmatprep.subr.mxu0 0.0
        %718 = vmatpush1.msra.mxu0 0.0
        %719 = vmatprep.subr.mxu0 0.0
        %720 = vmatpush1.msra.mxu0 0.0
        %721 = vmatprep.subr.mxu0 0.0
        %722 = vmatpush1.msra.mxu0 0.0
        %723 = vmatprep.subr.mxu0 0.0
        %724 = vmatpush1.msra.mxu0 0.0
        %725 = vmatprep.subr.mxu0 0.0
        %726 = vmatpush1.msra.mxu0 0.0
        %727 = vmatprep.subr.mxu0 0.0
        %728 = vmatpush1.msra.mxu0 0.0
        %729 = vmatprep.subr.mxu0 0.0
        %730 = vmatpush1.msra.mxu0 0.0
        %731 = vmatprep.subr.mxu0 0.0
        %732 = vmatpush1.msra.mxu0 0.0
        %733 = vmatprep.subr.mxu0 0.0
        %734 = vmatpush1.msra.mxu0 0.0
        %735 = vmatprep.subr.mxu0 0.0
        %736 = vmatpush1.msra.mxu0 0.0
        %737 = vmatprep.subr.mxu0 0.0
        %738 = vmatpush1.msra.mxu0 0.0
        %739 = vmatprep.subr.mxu0 0.0
        %740 = vmatpush1.msra.mxu0 0.0
        %741 = vmatprep.subr.mxu0 0.0
        %742 = vmatpush1.msra.mxu0 0.0
        %743 = vmatprep.subr.mxu0 0.0
        %744 = vmatpush1.msra.mxu0 0.0
        %745 = vmatprep.subr.mxu0 0.0
        %746 = vmatpush1.msra.mxu0 0.0
        %747 = vmatprep.subr.mxu0 0.0
        %748 = vmatpush1.msra.mxu0 0.0
        %749 = vmatprep.mubr.f32.mxu0 0.0
        %750 = vmatmul.mubr.f32.gmra.mrb[0].mxu0 %v683
        %v751 = vpop.f32.mrb[0].mxu0
        %v752 = vadd.f32 0.0, %v751
        %v753 = vpop.f32.mrb[0].mxu0
        %754 = vdwg.mxu0
        %v755 = vadd.f32 %v681, %v752
        %v756 = vtanh.pop %v755
        %757 = vst.msk [vmem:[%s680] sm:$0xff] %vm429, %v756
        %s758 = scalar_lea.vmem [#allocation2], 32
        %v759 = vld [vmem:[%s758] sm:$0xff]
        %v761 = vsel %vm429, %v756, 0
        %763 = vmatprep.subr.mxu0 0.0
        %764 = vmatpush1.msra.mxu0 %v438
        %765 = vmatprep.subr.mxu0 0.0
        %766 = vmatpush1.msra.mxu0 %v439
        %767 = vmatprep.subr.mxu0 0.0
        %768 = vmatpush1.msra.mxu0 %v440
        %769 = vmatprep.subr.mxu0 0.0
        %770 = vmatpush1.msra.mxu0 %v441
        %771 = vmatprep.subr.mxu0 0.0
        %772 = vmatpush1.msra.mxu0 %v442
        %773 = vmatprep.subr.mxu0 0.0
        %774 = vmatpush1.msra.mxu0 %v443
        %775 = vmatprep.subr.mxu0 0.0
        %776 = vmatpush1.msra.mxu0 %v444
        %777 = vmatprep.subr.mxu0 0.0
        %778 = vmatpush1.msra.mxu0 %v445
        %779 = vmatprep.subr.mxu0 0.0
        %780 = vmatpush1.msra.mxu0 0.0
        %781 = vmatprep.subr.mxu0 0.0
        %782 = vmatpush1.msra.mxu0 0.0
        %783 = vmatprep.subr.mxu0 0.0
        %784 = vmatpush1.msra.mxu0 0.0
        %785 = vmatprep.subr.mxu0 0.0
        %786 = vmatpush1.msra.mxu0 0.0
        %787 = vmatprep.subr.mxu0 0.0
        %788 = vmatpush1.msra.mxu0 0.0
        %789 = vmatprep.subr.mxu0 0.0
        %790 = vmatpush1.msra.mxu0 0.0
        %791 = vmatprep.subr.mxu0 0.0
        %792 = vmatpush1.msra.mxu0 0.0
        %793 = vmatprep.subr.mxu0 0.0
        %794 = vmatpush1.msra.mxu0 0.0
        %795 = vmatprep.subr.mxu0 0.0
        %796 = vmatpush1.msra.mxu0 0.0
        %797 = vmatprep.subr.mxu0 0.0
        %798 = vmatpush1.msra.mxu0 0.0
        %799 = vmatprep.subr.mxu0 0.0
        %800 = vmatpush1.msra.mxu0 0.0
        %801 = vmatprep.subr.mxu0 0.0
        %802 = vmatpush1.msra.mxu0 0.0
        %803 = vmatprep.subr.mxu0 0.0
        %804 = vmatpush1.msra.mxu0 0.0
        %805 = vmatprep.subr.mxu0 0.0
        %806 = vmatpush1.msra.mxu0 0.0
        %807 = vmatprep.subr.mxu0 0.0
        %808 = vmatpush1.msra.mxu0 0.0
        %809 = vmatprep.subr.mxu0 0.0
        %810 = vmatpush1.msra.mxu0 0.0
        %811 = vmatprep.subr.mxu0 0.0
        %812 = vmatpush1.msra.mxu0 0.0
        %813 = vmatprep.subr.mxu0 0.0
        %814 = vmatpush1.msra.mxu0 0.0
        %815 = vmatprep.subr.mxu0 0.0
        %816 = vmatpush1.msra.mxu0 0.0
        %817 = vmatprep.subr.mxu0 0.0
        %818 = vmatpush1.msra.mxu0 0.0
        %819 = vmatprep.subr.mxu0 0.0
        %820 = vmatpush1.msra.mxu0 0.0
        %821 = vmatprep.subr.mxu0 0.0
        %822 = vmatpush1.msra.mxu0 0.0
        %823 = vmatprep.subr.mxu0 0.0
        %824 = vmatpush1.msra.mxu0 0.0
        %825 = vmatprep.subr.mxu0 0.0
        %826 = vmatpush1.msra.mxu0 0.0
        %827 = vmatprep.mubr.f32.mxu0 0.0
        %828 = vmatmul.mubr.f32.gmra.mrb[0].mxu0 %v761
        %v829 = vpop.f32.mrb[0].mxu0
        %v830 = vadd.f32 0.0, %v829
        %v831 = vpop.f32.mrb[0].mxu0
        %832 = vdwg.mxu0
        %v833 = vadd.f32 %v759, %v830
        %v834 = vtanh.pop %v833
        %835 = vst.msk [vmem:[%s758] sm:$0xff] %vm429, %v834
        %s836 = scalar_lea.vmem [#allocation2], 40
        %v837 = vld [vmem:[%s836] sm:$0xff]
        %v839 = vsel %vm429, %v834, 0
        %841 = vmatprep.subr.mxu0 0.0
        %842 = vmatpush1.msra.mxu0 %v438
        %843 = vmatprep.subr.mxu0 0.0
        %844 = vmatpush1.msra.mxu0 %v439
        %845 = vmatprep.subr.mxu0 0.0
        %846 = vmatpush1.msra.mxu0 %v440
        %847 = vmatprep.subr.mxu0 0.0
        %848 = vmatpush1.msra.mxu0 %v441
        %849 = vmatprep.subr.mxu0 0.0
        %850 = vmatpush1.msra.mxu0 %v442
        %851 = vmatprep.subr.mxu0 0.0
        %852 = vmatpush1.msra.mxu0 %v443
        %853 = vmatprep.subr.mxu0 0.0
        %854 = vmatpush1.msra.mxu0 %v444
        %855 = vmatprep.subr.mxu0 0.0
        %856 = vmatpush1.msra.mxu0 %v445
        %857 = vmatprep.subr.mxu0 0.0
        %858 = vmatpush1.msra.mxu0 0.0
        %859 = vmatprep.subr.mxu0 0.0
        %860 = vmatpush1.msra.mxu0 0.0
        %861 = vmatprep.subr.mxu0 0.0
        %862 = vmatpush1.msra.mxu0 0.0
        %863 = vmatprep.subr.mxu0 0.0
        %864 = vmatpush1.msra.mxu0 0.0
        %865 = vmatprep.subr.mxu0 0.0
        %866 = vmatpush1.msra.mxu0 0.0
        %867 = vmatprep.subr.mxu0 0.0
        %868 = vmatpush1.msra.mxu0 0.0
        %869 = vmatprep.subr.mxu0 0.0
        %870 = vmatpush1.msra.mxu0 0.0
        %871 = vmatprep.subr.mxu0 0.0
        %872 = vmatpush1.msra.mxu0 0.0
        %873 = vmatprep.subr.mxu0 0.0
        %874 = vmatpush1.msra.mxu0 0.0
        %875 = vmatprep.subr.mxu0 0.0
        %876 = vmatpush1.msra.mxu0 0.0
        %877 = vmatprep.subr.mxu0 0.0
        %878 = vmatpush1.msra.mxu0 0.0
        %879 = vmatprep.subr.mxu0 0.0
        %880 = vmatpush1.msra.mxu0 0.0
        %881 = vmatprep.subr.mxu0 0.0
        %882 = vmatpush1.msra.mxu0 0.0
        %883 = vmatprep.subr.mxu0 0.0
        %884 = vmatpush1.msra.mxu0 0.0
        %885 = vmatprep.subr.mxu0 0.0
        %886 = vmatpush1.msra.mxu0 0.0
        %887 = vmatprep.subr.mxu0 0.0
        %888 = vmatpush1.msra.mxu0 0.0
        %889 = vmatprep.subr.mxu0 0.0
        %890 = vmatpush1.msra.mxu0 0.0
        %891 = vmatprep.subr.mxu0 0.0
        %892 = vmatpush1.msra.mxu0 0.0
        %893 = vmatprep.subr.mxu0 0.0
        %894 = vmatpush1.msra.mxu0 0.0
        %895 = vmatprep.subr.mxu0 0.0
        %896 = vmatpush1.msra.mxu0 0.0
        %897 = vmatprep.subr.mxu0 0.0
        %898 = vmatpush1.msra.mxu0 0.0
        %899 = vmatprep.subr.mxu0 0.0
        %900 = vmatpush1.msra.mxu0 0.0
        %901 = vmatprep.subr.mxu0 0.0
        %902 = vmatpush1.msra.mxu0 0.0
        %903 = vmatprep.subr.mxu0 0.0
        %904 = vmatpush1.msra.mxu0 0.0
        %905 = vmatprep.mubr.f32.mxu0 0.0
        %906 = vmatmul.mubr.f32.gmra.mrb[0].mxu0 %v839
        %v907 = vpop.f32.mrb[0].mxu0
        %v908 = vadd.f32 0.0, %v907
        %v909 = vpop.f32.mrb[0].mxu0
        %910 = vdwg.mxu0
        %v911 = vadd.f32 %v837, %v908
        %v912 = vtanh.pop %v911
        %913 = vst.msk [vmem:[%s836] sm:$0xff] %vm429, %v912
        %s914 = scalar_lea.vmem [#allocation2], 48
        %v915 = vld [vmem:[%s914] sm:$0xff]
        %v917 = vsel %vm429, %v912, 0
        %919 = vmatprep.subr.mxu0 0.0
        %920 = vmatpush1.msra.mxu0 %v438
        %921 = vmatprep.subr.mxu0 0.0
        %922 = vmatpush1.msra.mxu0 %v439
        %923 = vmatprep.subr.mxu0 0.0
        %924 = vmatpush1.msra.mxu0 %v440
        %925 = vmatprep.subr.mxu0 0.0
        %926 = vmatpush1.msra.mxu0 %v441
        %927 = vmatprep.subr.mxu0 0.0
        %928 = vmatpush1.msra.mxu0 %v442
        %929 = vmatprep.subr.mxu0 0.0
        %930 = vmatpush1.msra.mxu0 %v443
        %931 = vmatprep.subr.mxu0 0.0
        %932 = vmatpush1.msra.mxu0 %v444
        %933 = vmatprep.subr.mxu0 0.0
        %934 = vmatpush1.msra.mxu0 %v445
        %935 = vmatprep.subr.mxu0 0.0
        %936 = vmatpush1.msra.mxu0 0.0
        %937 = vmatprep.subr.mxu0 0.0
        %938 = vmatpush1.msra.mxu0 0.0
        %939 = vmatprep.subr.mxu0 0.0
        %940 = vmatpush1.msra.mxu0 0.0
        %941 = vmatprep.subr.mxu0 0.0
        %942 = vmatpush1.msra.mxu0 0.0
        %943 = vmatprep.subr.mxu0 0.0
        %944 = vmatpush1.msra.mxu0 0.0
        %945 = vmatprep.subr.mxu0 0.0
        %946 = vmatpush1.msra.mxu0 0.0
        %947 = vmatprep.subr.mxu0 0.0
        %948 = vmatpush1.msra.mxu0 0.0
        %949 = vmatprep.subr.mxu0 0.0
        %950 = vmatpush1.msra.mxu0 0.0
        %951 = vmatprep.subr.mxu0 0.0
        %952 = vmatpush1.msra.mxu0 0.0
        %953 = vmatprep.subr.mxu0 0.0
        %954 = vmatpush1.msra.mxu0 0.0
        %955 = vmatprep.subr.mxu0 0.0
        %956 = vmatpush1.msra.mxu0 0.0
        %957 = vmatprep.subr.mxu0 0.0
        %958 = vmatpush1.msra.mxu0 0.0
        %959 = vmatprep.subr.mxu0 0.0
        %960 = vmatpush1.msra.mxu0 0.0
        %961 = vmatprep.subr.mxu0 0.0
        %962 = vmatpush1.msra.mxu0 0.0
        %963 = vmatprep.subr.mxu0 0.0
        %964 = vmatpush1.msra.mxu0 0.0
        %965 = vmatprep.subr.mxu0 0.0
        %966 = vmatpush1.msra.mxu0 0.0
        %967 = vmatprep.subr.mxu0 0.0
        %968 = vmatpush1.msra.mxu0 0.0
        %969 = vmatprep.subr.mxu0 0.0
        %970 = vmatpush1.msra.mxu0 0.0
        %971 = vmatprep.subr.mxu0 0.0
        %972 = vmatpush1.msra.mxu0 0.0
        %973 = vmatprep.subr.mxu0 0.0
        %974 = vmatpush1.msra.mxu0 0.0
        %975 = vmatprep.subr.mxu0 0.0
        %976 = vmatpush1.msra.mxu0 0.0
        %977 = vmatprep.subr.mxu0 0.0
        %978 = vmatpush1.msra.mxu0 0.0
        %979 = vmatprep.subr.mxu0 0.0
        %980 = vmatpush1.msra.mxu0 0.0
        %981 = vmatprep.subr.mxu0 0.0
        %982 = vmatpush1.msra.mxu0 0.0
        %983 = vmatprep.mubr.f32.mxu0 0.0
        %984 = vmatmul.mubr.f32.gmra.mrb[0].mxu0 %v917
        %v985 = vpop.f32.mrb[0].mxu0
        %v986 = vadd.f32 0.0, %v985
        %v987 = vpop.f32.mrb[0].mxu0
        %988 = vdwg.mxu0
        %v989 = vadd.f32 %v915, %v986
        %v990 = vtanh.pop %v989
        %991 = vst.msk [vmem:[%s914] sm:$0xff] %vm429, %v990
        %s992 = scalar_lea.vmem [#allocation2], 56
        %v993 = vld [vmem:[%s992] sm:$0xff]
        %v995 = vsel %vm429, %v990, 0
        %997 = vmatprep.subr.mxu0 0.0
        %998 = vmatpush1.msra.mxu0 %v438
        %999 = vmatprep.subr.mxu0 0.0
        %1000 = vmatpush1.msra.mxu0 %v439
        %1001 = vmatprep.subr.mxu0 0.0
        %1002 = vmatpush1.msra.mxu0 %v440
        %1003 = vmatprep.subr.mxu0 0.0
        %1004 = vmatpush1.msra.mxu0 %v441
        %1005 = vmatprep.subr.mxu0 0.0
        %1006 = vmatpush1.msra.mxu0 %v442
        %1007 = vmatprep.subr.mxu0 0.0
        %1008 = vmatpush1.msra.mxu0 %v443
        %1009 = vmatprep.subr.mxu0 0.0
        %1010 = vmatpush1.msra.mxu0 %v444
        %1011 = vmatprep.subr.mxu0 0.0
        %1012 = vmatpush1.msra.mxu0 %v445
        %1013 = vmatprep.subr.mxu0 0.0
        %1014 = vmatpush1.msra.mxu0 0.0
        %1015 = vmatprep.subr.mxu0 0.0
        %1016 = vmatpush1.msra.mxu0 0.0
        %1017 = vmatprep.subr.mxu0 0.0
        %1018 = vmatpush1.msra.mxu0 0.0
        %1019 = vmatprep.subr.mxu0 0.0
        %1020 = vmatpush1.msra.mxu0 0.0
        %1021 = vmatprep.subr.mxu0 0.0
        %1022 = vmatpush1.msra.mxu0 0.0
        %1023 = vmatprep.subr.mxu0 0.0
        %1024 = vmatpush1.msra.mxu0 0.0
        %1025 = vmatprep.subr.mxu0 0.0
        %1026 = vmatpush1.msra.mxu0 0.0
        %1027 = vmatprep.subr.mxu0 0.0
        %1028 = vmatpush1.msra.mxu0 0.0
        %1029 = vmatprep.subr.mxu0 0.0
        %1030 = vmatpush1.msra.mxu0 0.0
        %1031 = vmatprep.subr.mxu0 0.0
        %1032 = vmatpush1.msra.mxu0 0.0
        %1033 = vmatprep.subr.mxu0 0.0
        %1034 = vmatpush1.msra.mxu0 0.0
        %1035 = vmatprep.subr.mxu0 0.0
        %1036 = vmatpush1.msra.mxu0 0.0
        %1037 = vmatprep.subr.mxu0 0.0
        %1038 = vmatpush1.msra.mxu0 0.0
        %1039 = vmatprep.subr.mxu0 0.0
        %1040 = vmatpush1.msra.mxu0 0.0
        %1041 = vmatprep.subr.mxu0 0.0
        %1042 = vmatpush1.msra.mxu0 0.0
        %1043 = vmatprep.subr.mxu0 0.0
        %1044 = vmatpush1.msra.mxu0 0.0
        %1045 = vmatprep.subr.mxu0 0.0
        %1046 = vmatpush1.msra.mxu0 0.0
        %1047 = vmatprep.subr.mxu0 0.0
        %1048 = vmatpush1.msra.mxu0 0.0
        %1049 = vmatprep.subr.mxu0 0.0
        %1050 = vmatpush1.msra.mxu0 0.0
        %1051 = vmatprep.subr.mxu0 0.0
        %1052 = vmatpush1.msra.mxu0 0.0
        %1053 = vmatprep.subr.mxu0 0.0
        %1054 = vmatpush1.msra.mxu0 0.0
        %1055 = vmatprep.subr.mxu0 0.0
        %1056 = vmatpush1.msra.mxu0 0.0
        %1057 = vmatprep.subr.mxu0 0.0
        %1058 = vmatpush1.msra.mxu0 0.0
        %1059 = vmatprep.subr.mxu0 0.0
        %1060 = vmatpush1.msra.mxu0 0.0
        %1061 = vmatprep.mubr.f32.mxu0 0.0
        %1062 = vmatmul.mubr.f32.gmra.mrb[0].mxu0 %v995
        %v1063 = vpop.f32.mrb[0].mxu0
        %v1064 = vadd.f32 0.0, %v1063
        %v1065 = vpop.f32.mrb[0].mxu0
        %1066 = vdwg.mxu0
        %v1067 = vadd.f32 %v993, %v1064
        %v1068 = vtanh.pop %v1067
        %1069 = vst.msk [vmem:[%s992] sm:$0xff] %vm429, %v1068
        %1070 = vst.msk [vmem:[#allocation3] sm:$0xff] %vm429, %v1068
        %v1071 = vld [vmem:[%s4] sm:$0x1]
        %v1072 = vld [vmem:[#allocation2] sm:$0xff]
        %v1073 = vld [vmem:[#allocation2 + $0x8] sm:$0xff]
        %v1074 = vld [vmem:[#allocation2 + $0x10] sm:$0xff]
        %v1075 = vld [vmem:[#allocation2 + $0x18] sm:$0xff]
        %v1076 = vld [vmem:[#allocation2 + $0x20] sm:$0xff]
        %v1077 = vld [vmem:[#allocation2 + $0x28] sm:$0xff]
        %v1078 = vld [vmem:[#allocation2 + $0x30] sm:$0xff]
        %v1079 = vld [vmem:[#allocation2 + $0x38] sm:$0xff]
        %v1081 = vlaneseq
        %v1082 = vshrl.u32 %v1081, 7
        %v1083 = vsub.s32 0, %v1082
        %v1084 = vrot.slane %v1071, %v1083
        %v1086 = vmul.f32 %v1072, %v1084
        %v1087 = vmul.f32 %v1073, %v1084
        %v1088 = vmul.f32 %v1074, %v1084
        %v1089 = vmul.f32 %v1075, %v1084
        %v1090 = vmul.f32 %v1076, %v1084
        %v1091 = vmul.f32 %v1077, %v1084
        %v1092 = vmul.f32 %v1078, %v1084
        %v1093 = vmul.f32 %v1079, %v1084
        %v1094 = vsel %vm429, %v1086, 0.0
        %1095 = vadd.xlane.f32.xlu0 %v1094
        %v1096 = vpop.xlane.xlu0 %1095
        %v1097 = vsel %vm429, %v1087, 0.0
        %1098 = vadd.xlane.f32.xlu0 %v1097
        %v1099 = vpop.xlane.xlu0 %1098
        %v1100 = vsel %vm429, %v1088, 0.0
        %1101 = vadd.xlane.f32.xlu0 %v1100
        %v1102 = vpop.xlane.xlu0 %1101
        %v1103 = vsel %vm429, %v1089, 0.0
        %1104 = vadd.xlane.f32.xlu0 %v1103
        %v1105 = vpop.xlane.xlu0 %1104
        %v1106 = vsel %vm429, %v1090, 0.0
        %1107 = vadd.xlane.f32.xlu0 %v1106
        %v1108 = vpop.xlane.xlu0 %1107
        %v1109 = vsel %vm429, %v1091, 0.0
        %1110 = vadd.xlane.f32.xlu0 %v1109
        %v1111 = vpop.xlane.xlu0 %1110
        %v1112 = vsel %vm429, %v1092, 0.0
        %1113 = vadd.xlane.f32.xlu0 %v1112
        %v1114 = vpop.xlane.xlu0 %1113
        %v1115 = vsel %vm429, %v1093, 0.0
        %1116 = vadd.xlane.f32.xlu0 %v1115
        %v1117 = vpop.xlane.xlu0 %1116
        %v1126 = vlaneseq
        %v1127 = vand.u32 %v1126, 127
        %v1128 = vlaneseq
        %v1129 = vshrl.u32 %v1128, 7
        %v1130 = vsub.s32 %v1127, %v1129
        %v1131 = vrot.slane %v1096, %v1130
        %v1132 = vlaneseq
        %v1133 = vshrl.u32 %v1132, 7
        %v1134 = vsub.s32 %v1127, %v1133
        %v1135 = vrot.slane %v1099, %v1134
        %v1136 = vlaneseq
        %v1137 = vshrl.u32 %v1136, 7
        %v1138 = vsub.s32 %v1127, %v1137
        %v1139 = vrot.slane %v1102, %v1138
        %v1140 = vlaneseq
        %v1141 = vshrl.u32 %v1140, 7
        %v1142 = vsub.s32 %v1127, %v1141
        %v1143 = vrot.slane %v1105, %v1142
        %v1144 = vlaneseq
        %v1145 = vshrl.u32 %v1144, 7
        %v1146 = vsub.s32 %v1127, %v1145
        %v1147 = vrot.slane %v1108, %v1146
        %v1148 = vlaneseq
        %v1149 = vshrl.u32 %v1148, 7
        %v1150 = vsub.s32 %v1127, %v1149
        %v1151 = vrot.slane %v1111, %v1150
        %v1152 = vlaneseq
        %v1153 = vshrl.u32 %v1152, 7
        %v1154 = vsub.s32 %v1127, %v1153
        %v1155 = vrot.slane %v1114, %v1154
        %v1156 = vlaneseq
        %v1157 = vshrl.u32 %v1156, 7
        %v1158 = vsub.s32 %v1127, %v1157
        %v1159 = vrot.slane %v1117, %v1158
        %vm1160 = vcmask 1041409
        %v1161 = vsel %vm1160, %v1135, %v1131
        %vm1162 = vcmask 1042434
        %v1163 = vsel %vm1162, %v1139, %v1161
        %vm1164 = vcmask 1043459
        %v1165 = vsel %vm1164, %v1143, %v1163
        %vm1166 = vcmask 1044484
        %v1167 = vsel %vm1166, %v1147, %v1165
        %vm1168 = vcmask 1045509
        %v1169 = vsel %vm1168, %v1151, %v1167
        %vm1170 = vcmask 1046534
        %v1171 = vsel %vm1170, %v1155, %v1169
        %vm1172 = vcmask 1047559
        %v1173 = vsel %vm1172, %v1159, %v1171
        %vm1175 = vcmask 64512
        %1176 = vst.msk [vmem:[%s272] sm:$0xff] %vm1175, %v1173
        %p1177 = scmp.lt.s32.totalorder %s20, 2
        %s1178 = scalar_select %p1177, %s20, 2
        %s1179 = smul.addr %s1178, 8
        %s1180 = scalar_lea.vmem %s5, %s1179
        // Predicated region
        $region57: #{tpu_custom_call.1} parent=39 // pred_check
          %p1181 = pneg %p148
        $region58: #{tpu_custom_call.1} parent=39 // pred_check_branch
          %1183 = sbr.rel (%p1181) target = $region60
        $region59: #{tpu_custom_call.1} parent=39 // pred_region
          _
        $region60: #{tpu_custom_call.1} parent=39 // pred_fallthru
          _
      $region40: #{tpu_custom_call.1} parent=5 // pred_fallthru
        _
      %p1184 = scmp.le.s32.totalorder 2, %s15
      // Predicated region
      $region61: #{tpu_custom_call.1} parent=5 // pred_check
        %p1185 = pneg %p1184
      $region62: #{tpu_custom_call.1} parent=5 // pred_check_branch
        %1187 = sbr.rel (%p1185) target = $region64
      $region63: #{tpu_custom_call.1} parent=5 // pred_region
        %s1188 = ssub.s32 %s15, 2
        // Predicated region
        $region65: #{tpu_custom_call.1} parent=63 // pred_check
          %p1189 = pneg %p154
        $region66: #{tpu_custom_call.1} parent=63 // pred_check_branch
          %1191 = sbr.rel (%p1189) target = $region68
        $region67: #{tpu_custom_call.1} parent=63 // pred_region
          %p1192 = scmp.lt.s32.totalorder %s21, 2
          %s1193 = scalar_select %p1192, %s21, 2
          %s1194 = smul.addr %s1193, 8
          %s1195 = scalar_lea.vmem %s5, %s1194
        $region68: #{tpu_custom_call.1} parent=63 // pred_fallthru
          _
      $region64: #{tpu_custom_call.1} parent=5 // pred_fallthru
        _
    $region6: #{tpu_custom_call.1} parent=1 // loop_footer
      %s19 = sadd.s32 1, %s15
    $region7: #{tpu_custom_call.1} parent=1 // loop_footer_branch
      %14 = sbr.rel target = $region3
    $region8: #{tpu_custom_call.1} parent=1 // loop_exit
      _
    %1196 = vsyncpa [#allocation5], 1
    %s1197 = scalar_lea.sflag [#allocation5], 1
    %1198 = vsyncpa %s1197, 1
    %1199 = vsyncpa [#allocation7], 1

</llo_original>
